<compile_context>
chip_gen: v7x
topology: tpu7x:2x2x1
jax: 0.10.0
libtpu: 0.0.40
codegen_flags: <defaults>
</compile_context>

<pallas_src>
import jax
import jax.numpy as jnp
from jax.experimental import pallas as pl
from jax.experimental.pallas import tpu as pltpu

HIDDEN_PAD = 128  # hidden=100 padded to a full 128-lane width


def _round_up(n, m):
    return (n + m - 1) // m * m


def clf_d_kernel(x_ref, w1_ref, b1_ref, w2_ref, b2_ref, o_ref):
    # fc1: (TB, dim) @ (dim, 128) on the MXU, f32 accumulation.
    h = jnp.dot(x_ref[...], w1_ref[...], preferred_element_type=jnp.float32)
    h = jnp.maximum(h + b1_ref[...], 0.0)                       # bias + ReLU (VPU)
    # fc2 with out_features=1: VPU multiply + lane reduce (avoids N=1 MXU push and
    # the (1,100)->(100,1) transpose through the XLU).
    z = jnp.sum(h * w2_ref[...], axis=-1, keepdims=True) + b2_ref[...]
    o_ref[...] = jax.nn.sigmoid(z)                              # EUP


def clf_d_forward(x, w1, b1, w2, b2, *, block_b=512, use_bf16_matmul=False):
    """x: (B, dim) f32; w1: (hidden, dim); b1: (hidden,); w2: (1, hidden); b2: (1,)."""
    B, dim = x.shape
    hidden = w1.shape[0]

    # --- parameter prep (plain JAX, once) ---
    # Pre-transpose w1 to (K, N) and zero-pad hidden -> 128 lanes.
    w1t = jnp.zeros((dim, HIDDEN_PAD), jnp.float32).at[:, :hidden].set(
        w1.T.astype(jnp.float32))
    b1p = jnp.zeros((1, HIDDEN_PAD), jnp.float32).at[:, :hidden].set(
        b1.astype(jnp.float32))
    w2p = jnp.zeros((1, HIDDEN_PAD), jnp.float32).at[:, :hidden].set(
        w2.reshape(-1).astype(jnp.float32))
    b2p = b2.reshape(1, 1).astype(jnp.float32)

    x = x.astype(jnp.float32)
    if use_bf16_matmul:  # v6e / v7x: halve the dominant HBM stream; accumulation stays f32
        x = x.astype(jnp.bfloat16)
        w1t = w1t.astype(jnp.bfloat16)

    # --- batch tiling (pad B to a multiple of the block size) ---
    tb = min(block_b, _round_up(B, 8))
    b_pad = _round_up(B, tb)
    if b_pad != B:
        x = jnp.pad(x, ((0, b_pad - B), (0, 0)))
    grid = (b_pad // tb,)

    x_bytes = x.dtype.itemsize
    w_bytes = w1t.dtype.itemsize
    cost = pl.CostEstimate(
        flops=2 * b_pad * dim * HIDDEN_PAD + 2 * b_pad * HIDDEN_PAD,
        transcendentals=b_pad,
        bytes_accessed=(b_pad * dim * x_bytes + dim * HIDDEN_PAD * w_bytes
                        + 3 * HIDDEN_PAD * 4 + b_pad * 4),
    )
    # double-buffered x + out tiles, resident weights/biases, plus headroom
    vmem_limit = int(2 * tb * dim * x_bytes + 2 * tb * 4
                     + dim * HIDDEN_PAD * w_bytes + 3 * HIDDEN_PAD * 4
                     + (2 << 20))

    out = pl.pallas_call(
        clf_d_kernel,
        out_shape=jax.ShapeDtypeStruct((b_pad, 1), jnp.float32),
        grid=grid,
        in_specs=[
            pl.BlockSpec((tb, dim), lambda i: (i, 0)),           # x: streamed over B
            pl.BlockSpec((dim, HIDDEN_PAD), lambda i: (0, 0)),   # w1^T: resident
            pl.BlockSpec((1, HIDDEN_PAD), lambda i: (0, 0)),     # b1: resident
            pl.BlockSpec((1, HIDDEN_PAD), lambda i: (0, 0)),     # w2 row: resident
            pl.BlockSpec((1, 1), lambda i: (0, 0)),              # b2: resident
        ],
        out_specs=pl.BlockSpec((tb, 1), lambda i: (i, 0)),
        compiler_params=pltpu.CompilerParams(
            dimension_semantics=("parallel",),  # independent batch tiles (v7x: 2 TCs)
            vmem_limit_bytes=vmem_limit,
        ),
        cost_estimate=cost,
    )(x, w1t, b1p, w2p, b2p)

    return out[:B]


def init_params(key, dim=128):
    # Matches weights_init_classifier for nn.Linear: weight ~ U(-0.1, 0.1), bias = 0.
    k1, k2 = jax.random.split(key)
    w1 = jax.random.uniform(k1, (100, dim), jnp.float32, minval=-0.1, maxval=0.1)
    b1 = jnp.zeros((100,), jnp.float32)
    w2 = jax.random.uniform(k2, (1, 100), jnp.float32, minval=-0.1, maxval=0.1)
    b2 = jnp.zeros((1,), jnp.float32)
    return w1, b1, w2, b2


def _ref(x, w1, b1, w2, b2):
    return jax.nn.sigmoid(jnp.maximum(x @ w1.T + b1, 0.0) @ w2.T + b2)


if __name__ == "__main__":
    key = jax.random.PRNGKey(0)
    kx, kp, kx2 = jax.random.split(key, 3)

    dim = 128
    w1, b1, w2, b2 = init_params(kp, dim=dim)

    # Small shape (matches spec default dim=128).
    B = 8
    x = jax.random.normal(kx, (B, dim), jnp.float32)
    out = jax.block_until_ready(clf_d_forward(x, w1, b1, w2, b2))
    ref = _ref(x, w1, b1, w2, b2)
    assert out.shape == (B, 1)
    assert jnp.allclose(out, ref, atol=1e-5, rtol=1e-5)

    # Exercise batch tiling + ragged-B padding (B not a multiple of the block size).
    B2 = 300
    x2 = jax.random.normal(kx2, (B2, dim), jnp.float32)
    out2 = jax.block_until_ready(clf_d_forward(x2, w1, b1, w2, b2, block_b=128))
    ref2 = _ref(x2, w1, b1, w2, b2)
    assert out2.shape == (B2, 1)
    assert jnp.allclose(out2, ref2, atol=1e-5, rtol=1e-5)

    print("KERNEL_OK")
</pallas_src>

<mosaic_0001>
module attributes {stable_mosaic.version = 11 : i64} {
  func.func @clf_d_kernel(%arg0: i32, %arg1: memref<8x128xf32, #tpu.memory_space<vmem>>, %arg2: memref<128x128xf32, #tpu.memory_space<vmem>>, %arg3: memref<1x128xf32, #tpu.memory_space<vmem>>, %arg4: memref<1x128xf32, #tpu.memory_space<vmem>>, %arg5: memref<1x1xf32, #tpu.memory_space<vmem>>, %arg6: memref<8x1xf32, #tpu.memory_space<vmem>>) attributes {dimension_semantics = [#tpu.dimension_semantics<parallel>], iteration_bounds = array<i64: 1>, scalar_prefetch = 0 : i64, scratch_operands = 0 : i64, tpu.core_type = #tpu.core_type<tc>, window_params = [{transform_indices = @transform_0, window_bounds = array<i64: 8, 128>}, {pipeline_mode = #tpu.pipeline_mode<synchronous>, transform_indices = @transform_1, window_bounds = array<i64: 128, 128>}, {pipeline_mode = #tpu.pipeline_mode<synchronous>, transform_indices = @transform_2, window_bounds = array<i64: 1, 128>}, {pipeline_mode = #tpu.pipeline_mode<synchronous>, transform_indices = @transform_3, window_bounds = array<i64: 1, 128>}, {pipeline_mode = #tpu.pipeline_mode<synchronous>, transform_indices = @transform_4, window_bounds = array<i64: 1, 1>}, {transform_indices = @transform_5, window_bounds = array<i64: 8, 1>}]} {
    %c0 = arith.constant 0 : index
    %c0_0 = arith.constant 0 : index
    %0 = vector.load %arg1[%c0, %c0_0] : memref<8x128xf32, #tpu.memory_space<vmem>>, vector<8x128xf32>
    %c0_1 = arith.constant 0 : index
    %c0_2 = arith.constant 0 : index
    %1 = vector.load %arg2[%c0_1, %c0_2] : memref<128x128xf32, #tpu.memory_space<vmem>>, vector<128x128xf32>
    %cst = arith.constant dense<0.000000e+00> : vector<8x128xf32>
    %2 = tpu.matmul %0, %1, %cst {dimension_numbers = #tpu.dot_dimension_numbers<[1], [0], [0], [1], [0, 0, 1, 1], [], []>} : vector<8x128xf32>, vector<128x128xf32>, vector<8x128xf32> -> vector<8x128xf32>
    %c0_3 = arith.constant 0 : index
    %c0_4 = arith.constant 0 : index
    %3 = vector.load %arg3[%c0_3, %c0_4] : memref<1x128xf32, #tpu.memory_space<vmem>>, vector<1x128xf32>
    %4 = vector.broadcast %3 : vector<1x128xf32> to vector<8x128xf32>
    %5 = arith.addf %2, %4 : vector<8x128xf32>
    %cst_5 = arith.constant 0.000000e+00 : f32
    %6 = vector.broadcast %cst_5 : f32 to vector<8x128xf32>
    %7 = arith.maximumf %5, %6 : vector<8x128xf32>
    %c0_6 = arith.constant 0 : index
    %c0_7 = arith.constant 0 : index
    %8 = vector.load %arg4[%c0_6, %c0_7] : memref<1x128xf32, #tpu.memory_space<vmem>>, vector<1x128xf32>
    %9 = vector.broadcast %8 : vector<1x128xf32> to vector<8x128xf32>
    %10 = arith.mulf %7, %9 : vector<8x128xf32>
    %cst_8 = arith.constant dense<0.000000e+00> : vector<8xf32>
    %11 = vector.multi_reduction <add>, %10, %cst_8 [1] : vector<8x128xf32> to vector<8xf32>
    %12 = vector.shape_cast %11 : vector<8xf32> to vector<8x1xf32>
    %c0_9 = arith.constant 0 : index
    %c0_10 = arith.constant 0 : index
    %13 = vector.load %arg5[%c0_9, %c0_10] : memref<1x1xf32, #tpu.memory_space<vmem>>, vector<1x1xf32>
    %14 = vector.broadcast %13 : vector<1x1xf32> to vector<8x1xf32>
    %15 = arith.addf %12, %14 : vector<8x1xf32>
    %16 = arith.negf %15 : vector<8x1xf32>
    %17 = math.exp %16 : vector<8x1xf32>
    %cst_11 = arith.constant 1.000000e+00 : f32
    %18 = vector.broadcast %cst_11 : f32 to vector<8x1xf32>
    %19 = arith.addf %18, %17 : vector<8x1xf32>
    %20 = arith.divf %18, %19 : vector<8x1xf32>
    %c0_12 = arith.constant 0 : index
    %c0_13 = arith.constant 0 : index
    %21 = vector.load %arg6[%c0_12, %c0_13] : memref<8x1xf32, #tpu.memory_space<vmem>>, vector<8x1xf32>
    tpu.vector_store %arg6[%c0_12, %c0_13], %20 {strides = array<i32>} : memref<8x1xf32, #tpu.memory_space<vmem>>, vector<8x1xf32>,
    return
  }
  func.func @transform_0(%arg0: i32) -> (i32, i32) {
    %c0_i32 = arith.constant 0 : i32
    %c0_i32_0 = arith.constant 0 : i32
    return %arg0, %c0_i32 : i32, i32
  }
  func.func @transform_1(%arg0: i32) -> (i32, i32) {
    %c0_i32 = arith.constant 0 : i32
    %c0_i32_0 = arith.constant 0 : i32
    %c0_i32_1 = arith.constant 0 : i32
    return %c0_i32, %c0_i32_0 : i32, i32
  }
  func.func @transform_2(%arg0: i32) -> (i32, i32) {
    %c0_i32 = arith.constant 0 : i32
    %c0_i32_0 = arith.constant 0 : i32
    %c0_i32_1 = arith.constant 0 : i32
    return %c0_i32, %c0_i32_0 : i32, i32
  }
  func.func @transform_3(%arg0: i32) -> (i32, i32) {
    %c0_i32 = arith.constant 0 : i32
    %c0_i32_0 = arith.constant 0 : i32
    %c0_i32_1 = arith.constant 0 : i32
    return %c0_i32, %c0_i32_0 : i32, i32
  }
  func.func @transform_4(%arg0: i32) -> (i32, i32) {
    %c0_i32 = arith.constant 0 : i32
    %c0_i32_0 = arith.constant 0 : i32
    %c0_i32_1 = arith.constant 0 : i32
    return %c0_i32, %c0_i32_0 : i32, i32
  }
  func.func @transform_5(%arg0: i32) -> (i32, i32) {
    %c0_i32 = arith.constant 0 : i32
    %c0_i32_0 = arith.constant 0 : i32
    return %arg0, %c0_i32 : i32, i32
  }
}

</mosaic_0001>

<llo_original>
// kernel: tpu_custom_call.1
$region0: #{tpu_custom_call.1}
  #allocation0 [shape = 'u32[]', space=smem, size = 0x4, offset = 0x4, fixed_abs, tag = 'smem constant byte address 0x4 - core index']
  #allocation1 [shape = 'u32[144,128]{1,0:T(1,128)}', space=vmem, size = 0x12000, scoped, tag = 'internal scratch']
  #allocation2 [shape = 'f32[1,1]{1,0:T(1,128)S(1)}', space=vmem, size = 0x200, scoped, tag = 'scoped memory for tpu_custom_call.1']
  %s0 = inlined_call_operand.hbm [shape: f32[8,128], index: 0, kind: input, shape index: {}]
  %s1 = inlined_call_operand.hbm [shape: f32[128,128], index: 1, kind: input, shape index: {}]
  %s2 = inlined_call_operand.vmem [shape: f32[1,128], index: 2, kind: input, shape index: {}]
  %s3 = inlined_call_operand.vmem [shape: f32[1,128], index: 3, kind: input, shape index: {}]
  %s4 = inlined_call_operand.<no memory space> [shape: f32[1,1], index: 4, kind: input, shape index: {}]
  %s5 = inlined_call_operand.vmem [shape: f32[8,1], index: 5, kind: output, shape index: {}]
  %s6 = sld [smem:[#allocation0]]
  $region38: #{tpu_custom_call.1} parent=0
    _
  %s8 = ssub.s32 1, %s6
  %s9 = scalar_select 0, %s8, %s6
  %v10 = vstv %s4
  %11 = vst [vmem:[#allocation2] sm:$0x1] %v10
  $region1: #{tpu_custom_call.1} parent=0
    #allocation3 [shape = 'u8[4096]{0}', space=vmem, size = 0x1000, scoped, tag = 'input window, operand 0, single buffered']
    #allocation4 [shape = 's32[1]{0}', space=sflag, size = 0x4, scoped, tag = 'scoped memory for tpu_custom_call.1']
    #allocation5 [shape = 'u8[65536]{0}', space=vmem, size = 0x10000, scoped, tag = 'input window, operand 1, single buffered']
    #allocation6 [shape = 's32[1]{0}', space=sflag, size = 0x4, scoped, tag = 'scoped memory for tpu_custom_call.1']
    %12 = vsyncpa [#allocation4], 0
    %13 = vsyncpa [#allocation6], 0
    // Predicated region
    $region2: #{tpu_custom_call.1} parent=1 // pred_check
      _
    $region3: #{tpu_custom_call.1} parent=1 // pred_check_branch
      %15 = sbr.rel (0) target = $region5
    $region4: #{tpu_custom_call.1} parent=1 // pred_region
      %s17 = ssub.s32 128, 128
      %18 = vsyncadd [#allocation4], %s17
      %s20 = sshll.u32 [#allocation3], 4
      %s21 = int_to_ptr.vmem [resolvable:$true] %s20
      %23 = dma.hbm_to_vmem [thread:$0]  %s0, 128, %s21, [#allocation4]
    $region5: #{tpu_custom_call.1} parent=1 // pred_fallthru
      _
    // Predicated region
    $region6: #{tpu_custom_call.1} parent=1 // pred_check
      _
    $region7: #{tpu_custom_call.1} parent=1 // pred_check_branch
      %25 = sbr.rel (0) target = $region9
    $region8: #{tpu_custom_call.1} parent=1 // pred_region
      %s27 = ssub.s32 2048, 2048
      %28 = vsyncadd [#allocation6], %s27
      %s29 = sshll.u32 [#allocation5], 4
      %s30 = int_to_ptr.vmem [resolvable:$true] %s29
      %35 = dma.hbm_to_vmem [thread:$0]  %s1, 2048, %s30, [#allocation6], 128, 128, 8
    $region9: #{tpu_custom_call.1} parent=1 // pred_fallthru
      _
    // Predicated region
    $region10: #{tpu_custom_call.1} parent=1 // pred_check
      _
    $region11: #{tpu_custom_call.1} parent=1 // pred_check_branch
      %37 = sbr.rel (0) target = $region13
    $region12: #{tpu_custom_call.1} parent=1 // pred_region
      _
    $region13: #{tpu_custom_call.1} parent=1 // pred_fallthru
      _
    // Predicated region
    $region14: #{tpu_custom_call.1} parent=1 // pred_check
      _
    $region15: #{tpu_custom_call.1} parent=1 // pred_check_branch
      %39 = sbr.rel (0) target = $region17
    $region16: #{tpu_custom_call.1} parent=1 // pred_region
      _
    $region17: #{tpu_custom_call.1} parent=1 // pred_fallthru
      _
    // Predicated region
    $region18: #{tpu_custom_call.1} parent=1 // pred_check
      _
    $region19: #{tpu_custom_call.1} parent=1 // pred_check_branch
      %41 = sbr.rel (0) target = $region21
    $region20: #{tpu_custom_call.1} parent=1 // pred_region
      _
    $region21: #{tpu_custom_call.1} parent=1 // pred_fallthru
      _
    // Predicated region
    $region22: #{tpu_custom_call.1} parent=1 // pred_check
      _
    $region23: #{tpu_custom_call.1} parent=1 // pred_check_branch
      %43 = sbr.rel (0) target = $region25
    $region24: #{tpu_custom_call.1} parent=1 // pred_region
      %44 = dma.done [#allocation4], 128
    $region25: #{tpu_custom_call.1} parent=1 // pred_fallthru
      _
    // Predicated region
    $region26: #{tpu_custom_call.1} parent=1 // pred_check
      _
    $region27: #{tpu_custom_call.1} parent=1 // pred_check_branch
      %46 = sbr.rel (0) target = $region29
    $region28: #{tpu_custom_call.1} parent=1 // pred_region
      %47 = dma.done [#allocation6], 2048
    $region29: #{tpu_custom_call.1} parent=1 // pred_fallthru
      _
    %v48 = vld [vmem:[#allocation3] sm:$0xff]
    %v49 = vld [vmem:[#allocation5] sm:$0xff]
    %v50 = vld [vmem:[#allocation5 + $0x8] sm:$0xff]
    %v51 = vld [vmem:[#allocation5 + $0x10] sm:$0xff]
    %v52 = vld [vmem:[#allocation5 + $0x18] sm:$0xff]
    %v53 = vld [vmem:[#allocation5 + $0x20] sm:$0xff]
    %v54 = vld [vmem:[#allocation5 + $0x28] sm:$0xff]
    %v55 = vld [vmem:[#allocation5 + $0x30] sm:$0xff]
    %v56 = vld [vmem:[#allocation5 + $0x38] sm:$0xff]
    %v57 = vld [vmem:[#allocation5 + $0x40] sm:$0xff]
    %v58 = vld [vmem:[#allocation5 + $0x48] sm:$0xff]
    %v59 = vld [vmem:[#allocation5 + $0x50] sm:$0xff]
    %v60 = vld [vmem:[#allocation5 + $0x58] sm:$0xff]
    %v61 = vld [vmem:[#allocation5 + $0x60] sm:$0xff]
    %v62 = vld [vmem:[#allocation5 + $0x68] sm:$0xff]
    %v63 = vld [vmem:[#allocation5 + $0x70] sm:$0xff]
    %v64 = vld [vmem:[#allocation5 + $0x78] sm:$0xff]
    %v65 = vld [vmem:[%s2] sm:$0x1]
    %v67 = vlaneseq
    %v68 = vshrl.u32 %v67, 7
    %v69 = vsub.s32 0, %v68
    %v70 = vrot.slane %v65, %v69
    %72 = vmatprep.subr.mxu0 0.0
    %73 = vmatpush1.msra.mxu0 %v49
    %74 = vmatprep.subr.mxu0 0.0
    %75 = vmatpush1.msra.mxu0 %v50
    %76 = vmatprep.subr.mxu0 0.0
    %77 = vmatpush1.msra.mxu0 %v51
    %78 = vmatprep.subr.mxu0 0.0
    %79 = vmatpush1.msra.mxu0 %v52
    %80 = vmatprep.subr.mxu0 0.0
    %81 = vmatpush1.msra.mxu0 %v53
    %82 = vmatprep.subr.mxu0 0.0
    %83 = vmatpush1.msra.mxu0 %v54
    %84 = vmatprep.subr.mxu0 0.0
    %85 = vmatpush1.msra.mxu0 %v55
    %86 = vmatprep.subr.mxu0 0.0
    %87 = vmatpush1.msra.mxu0 %v56
    %88 = vmatprep.subr.mxu0 0.0
    %89 = vmatpush1.msra.mxu0 %v57
    %90 = vmatprep.subr.mxu0 0.0
    %91 = vmatpush1.msra.mxu0 %v58
    %92 = vmatprep.subr.mxu0 0.0
    %93 = vmatpush1.msra.mxu0 %v59
    %94 = vmatprep.subr.mxu0 0.0
    %95 = vmatpush1.msra.mxu0 %v60
    %96 = vmatprep.subr.mxu0 0.0
    %97 = vmatpush1.msra.mxu0 %v61
    %98 = vmatprep.subr.mxu0 0.0
    %99 = vmatpush1.msra.mxu0 %v62
    %100 = vmatprep.subr.mxu0 0.0
    %101 = vmatpush1.msra.mxu0 %v63
    %102 = vmatprep.subr.mxu0 0.0
    %103 = vmatpush1.msra.mxu0 %v64
    %104 = vmatprep.subr.mxu0 0.0
    %105 = vmatpush1.msra.mxu0 0.0
    %106 = vmatprep.subr.mxu0 0.0
    %107 = vmatpush1.msra.mxu0 0.0
    %108 = vmatprep.subr.mxu0 0.0
    %109 = vmatpush1.msra.mxu0 0.0
    %110 = vmatprep.subr.mxu0 0.0
    %111 = vmatpush1.msra.mxu0 0.0
    %112 = vmatprep.subr.mxu0 0.0
    %113 = vmatpush1.msra.mxu0 0.0
    %114 = vmatprep.subr.mxu0 0.0
    %115 = vmatpush1.msra.mxu0 0.0
    %116 = vmatprep.subr.mxu0 0.0
    %117 = vmatpush1.msra.mxu0 0.0
    %118 = vmatprep.subr.mxu0 0.0
    %119 = vmatpush1.msra.mxu0 0.0
    %120 = vmatprep.subr.mxu0 0.0
    %121 = vmatpush1.msra.mxu0 0.0
    %122 = vmatprep.subr.mxu0 0.0
    %123 = vmatpush1.msra.mxu0 0.0
    %124 = vmatprep.subr.mxu0 0.0
    %125 = vmatpush1.msra.mxu0 0.0
    %126 = vmatprep.subr.mxu0 0.0
    %127 = vmatpush1.msra.mxu0 0.0
    %128 = vmatprep.subr.mxu0 0.0
    %129 = vmatpush1.msra.mxu0 0.0
    %130 = vmatprep.subr.mxu0 0.0
    %131 = vmatpush1.msra.mxu0 0.0
    %132 = vmatprep.subr.mxu0 0.0
    %133 = vmatpush1.msra.mxu0 0.0
    %134 = vmatprep.subr.mxu0 0.0
    %135 = vmatpush1.msra.mxu0 0.0
    %136 = vmatprep.mubr.f32.mxu0 0.0
    %137 = vmatmul.mubr.f32.gmra.mrb[0].mxu0 %v48
    %v138 = vpop.f32.mrb[0].mxu0
    %v139 = vadd.f32 %v70, %v138
    %v140 = vpop.f32.mrb[0].mxu0
    %141 = vdwg.mxu0
    %v142 = vmax.f32 %v139, 0.0
    %v143 = vld [vmem:[%s3] sm:$0x1]
    %v145 = vlaneseq
    %v146 = vshrl.u32 %v145, 7
    %v147 = vsub.s32 0, %v146
    %v148 = vrot.slane %v143, %v147
    %v150 = vmul.f32 %v142, %v148
    %151 = vadd.xlane.f32.xlu0 %v150
    %v152 = vpop.xlane.xlu0 %151
    %v153 = vld [vmem:[#allocation2] sm:$0x1]
    %v155 = vlaneseq
    %v156 = vshrl.u32 %v155, 7
    %v157 = vsub.s32 0, %v156
    %v158 = vrot.slane %v153, %v157
    %v160 = vadd.f32 %v152, %v158
    %v161 = vxor.u32 %v160, 2147483648
    %v162 = vmul.f32 %v161, 1.442695
    %v163 = vpow.pop %v162
    %v164 = vadd.f32 %v163, 1.0
    %v165 = vrcp.pop %v164
    %v166 = vmul.f32 1.0, %v165
    %vm167 = vcmask 7168
    %168 = vst.msk [vmem:[%s5] sm:$0xff] %vm167, %v166
    // Predicated region
    $region30: #{tpu_custom_call.1} parent=1 // pred_check
      _
    $region31: #{tpu_custom_call.1} parent=1 // pred_check_branch
      %170 = sbr.rel (0) target = $region33
    $region32: #{tpu_custom_call.1} parent=1 // pred_region
      _
    $region33: #{tpu_custom_call.1} parent=1 // pred_fallthru
      _
    // Predicated region
    $region34: #{tpu_custom_call.1} parent=1 // pred_check
      _
    $region35: #{tpu_custom_call.1} parent=1 // pred_check_branch
      %172 = sbr.rel (0) target = $region37
    $region36: #{tpu_custom_call.1} parent=1 // pred_region
      _
    $region37: #{tpu_custom_call.1} parent=1 // pred_fallthru
      _
    %173 = vsyncpa [#allocation4], 1
    %174 = vsyncpa [#allocation6], 1

</llo_original>
